<compile_context>
chip_gen: v6e
topology: v6e:2x2x1
jax: 0.10.0
libtpu: 0.0.40
codegen_flags: <defaults>
</compile_context>

<pallas_src>
import functools

import jax
import jax.numpy as jnp
from jax.experimental import pallas as pl
from jax.experimental.pallas import tpu as pltpu

_LANE = 128


def _layernorm_kernel(x_ref, g_ref, b_ref, o_ref, *, eps, inv_c):
    # x_ref/o_ref: (bB, C, T_S, 128); g_ref/b_ref: (1, C, 1, 1)
    x = x_ref[...].astype(jnp.float32)
    # Channel reduction runs over a leading (non-vreg) axis -> C-1 cheap VALU
    # adds per vreg, full vreg occupancy even for small C.
    mean = jnp.sum(x, axis=1, keepdims=True) * inv_c          # (bB,1,T_S,128)
    xc = x - mean                                             # hoisted, reused
    var = jnp.sum(xc * xc, axis=1, keepdims=True) * inv_c     # biased variance
    inv = jax.lax.rsqrt(var + eps)                            # EUP rsqrt
    g = g_ref[...].astype(jnp.float32)                        # (1,C,1,1) broadcast
    b = b_ref[...].astype(jnp.float32)
    o_ref[...] = (xc * inv * g + b).astype(o_ref.dtype)


def layer_norm_nchw(x, g, b, eps=1e-5):
    """x: (B, C, H, W); g, b: (1, C, 1, 1). Returns (B, C, H, W)."""
    B, C, H, W = x.shape
    HW = H * W
    S_pad = pl.cdiv(HW, _LANE)
    HW_pad = S_pad * _LANE

    x3 = x.reshape(B, C, HW)
    if HW_pad != HW:
        # Padded spatial positions never mix with real ones (reduction is over
        # C), and are sliced away after the kernel.
        x3 = jnp.pad(x3, ((0, 0), (0, 0), (0, HW_pad - HW)))
    x4 = x3.reshape(B, C, S_pad, _LANE)
    g4 = g.reshape(1, C, 1, 1)
    b4 = b.reshape(1, C, 1, 1)

    itemsize = x.dtype.itemsize
    target_tile_bytes = 2 * 1024 * 1024  # ~2 MiB input tile per grid step

    # Spatial sub-tile: multiple of 8 sublanes, or the full extent if small.
    max_ts = max(1, target_tile_bytes // (C * _LANE * itemsize))
    if S_pad <= max_ts or S_pad <= 8:
        t_s = S_pad
    else:
        t_s = max(8, (min(max_ts, S_pad) // 8) * 8)
    # TODO(synk): for very large C (C*8*128*itemsize > target) a C-tiled,
    # accumulating variant would be needed to bound VMEM further.

    # Fold batch elements when the whole-spatial tile is still small, so each
    # grid step moves a reasonable slab (amortize ~0.35us/step overhead).
    if t_s == S_pad:
        per_b = C * S_pad * _LANE * itemsize
        bB = int(max(1, min(B, target_tile_bytes // max(per_b, 1))))
    else:
        bB = 1

    grid = (pl.cdiv(B, bB), pl.cdiv(S_pad, t_s))

    kernel = functools.partial(_layernorm_kernel, eps=float(eps), inv_c=1.0 / C)
    out4 = pl.pallas_call(
        kernel,
        out_shape=jax.ShapeDtypeStruct((B, C, S_pad, _LANE), x.dtype),
        grid_spec=pltpu.PrefetchScalarGridSpec(
            num_scalar_prefetch=0,
            grid=grid,
            in_specs=[
                pl.BlockSpec((bB, C, t_s, _LANE), lambda i, j: (i, 0, j, 0)),
                pl.BlockSpec((1, C, 1, 1), lambda i, j: (0, 0, 0, 0)),
                pl.BlockSpec((1, C, 1, 1), lambda i, j: (0, 0, 0, 0)),
            ],
            out_specs=pl.BlockSpec((bB, C, t_s, _LANE),
                                   lambda i, j: (i, 0, j, 0)),
        ),
        compiler_params=pltpu.CompilerParams(
            dimension_semantics=("parallel", "parallel"),
            vmem_limit_bytes=32 * 1024 * 1024,
        ),
    )(x4, g4, b4)

    out3 = out4.reshape(B, C, HW_pad)
    if HW_pad != HW:
        out3 = out3[:, :, :HW]
    return out3.reshape(B, C, H, W)


def _reference(x, g, b, eps=1e-5):
    x32 = x.astype(jnp.float32)
    mean = jnp.mean(x32, axis=1, keepdims=True)
    var = jnp.mean((x32 - mean) ** 2, axis=1, keepdims=True)
    return ((x32 - mean) / jnp.sqrt(var + eps) * g + b).astype(x.dtype)


if __name__ == "__main__":
    key = jax.random.PRNGKey(0)
    kx, kg, kb = jax.random.split(key, 3)

    B, C, H, W = 2, 4, 16, 16
    x = jax.random.normal(kx, (B, C, H, W), dtype=jnp.float32)
    # Module __init__ uses ones/zeros of shape (1, C, 1, 1); perturb
    # deterministically so the affine part is actually exercised.
    g = jnp.ones((1, C, 1, 1), jnp.float32) + 0.1 * jax.random.normal(
        kg, (1, C, 1, 1), jnp.float32)
    b = jnp.zeros((1, C, 1, 1), jnp.float32) + 0.1 * jax.random.normal(
        kb, (1, C, 1, 1), jnp.float32)

    out = layer_norm_nchw(x, g, b, eps=1e-5)
    out = jax.block_until_ready(out)

    ref = _reference(x, g, b, eps=1e-5)
    assert out.shape == (B, C, H, W)
    assert jnp.allclose(out, ref, atol=1e-5, rtol=1e-5), "mismatch vs reference"

    print("KERNEL_OK")
</pallas_src>

<mosaic_0001>
module attributes {stable_mosaic.version = 11 : i64} {
  func.func @_layernorm_kernel(%arg0: i32, %arg1: i32, %arg2: memref<2x4x2x128xf32, #tpu.memory_space<vmem>>, %arg3: memref<1x4x1x1xf32, #tpu.memory_space<vmem>>, %arg4: memref<1x4x1x1xf32, #tpu.memory_space<vmem>>, %arg5: memref<2x4x2x128xf32, #tpu.memory_space<vmem>>) attributes {dimension_semantics = [#tpu.dimension_semantics<parallel>, #tpu.dimension_semantics<parallel>], iteration_bounds = array<i64: 1, 1>, scalar_prefetch = 0 : i64, scratch_operands = 0 : i64, tpu.core_type = #tpu.core_type<tc>, window_params = [{transform_indices = @transform_0, window_bounds = array<i64: 2, 4, 2, 128>}, {pipeline_mode = #tpu.pipeline_mode<synchronous>, transform_indices = @transform_1, window_bounds = array<i64: 1, 4, 1, 1>}, {pipeline_mode = #tpu.pipeline_mode<synchronous>, transform_indices = @transform_2, window_bounds = array<i64: 1, 4, 1, 1>}, {transform_indices = @transform_3, window_bounds = array<i64: 2, 4, 2, 128>}]} {
    %c0 = arith.constant 0 : index
    %c0_0 = arith.constant 0 : index
    %c0_1 = arith.constant 0 : index
    %c0_2 = arith.constant 0 : index
    %0 = vector.load %arg2[%c0, %c0_0, %c0_1, %c0_2] : memref<2x4x2x128xf32, #tpu.memory_space<vmem>>, vector<2x4x2x128xf32>
    %cst = arith.constant dense<0.000000e+00> : vector<2x2x128xf32>
    %1 = vector.multi_reduction <add>, %0, %cst [1] : vector<2x4x2x128xf32> to vector<2x2x128xf32>
    %2 = vector.shape_cast %1 : vector<2x2x128xf32> to vector<2x1x2x128xf32>
    %cst_3 = arith.constant 2.500000e-01 : f32
    %3 = vector.broadcast %cst_3 : f32 to vector<2x1x2x128xf32>
    %4 = arith.mulf %2, %3 : vector<2x1x2x128xf32>
    %5 = vector.broadcast %4 : vector<2x1x2x128xf32> to vector<2x4x2x128xf32>
    %6 = arith.subf %0, %5 : vector<2x4x2x128xf32>
    %7 = arith.mulf %6, %6 : vector<2x4x2x128xf32>
    %cst_4 = arith.constant dense<0.000000e+00> : vector<2x2x128xf32>
    %8 = vector.multi_reduction <add>, %7, %cst_4 [1] : vector<2x4x2x128xf32> to vector<2x2x128xf32>
    %9 = vector.shape_cast %8 : vector<2x2x128xf32> to vector<2x1x2x128xf32>
    %cst_5 = arith.constant 2.500000e-01 : f32
    %10 = vector.broadcast %cst_5 : f32 to vector<2x1x2x128xf32>
    %11 = arith.mulf %9, %10 : vector<2x1x2x128xf32>
    %cst_6 = arith.constant 9.99999974E-6 : f32
    %12 = vector.broadcast %cst_6 : f32 to vector<2x1x2x128xf32>
    %13 = arith.addf %11, %12 : vector<2x1x2x128xf32>
    %14 = math.rsqrt %13 : vector<2x1x2x128xf32>
    %c0_7 = arith.constant 0 : index
    %c0_8 = arith.constant 0 : index
    %c0_9 = arith.constant 0 : index
    %c0_10 = arith.constant 0 : index
    %15 = vector.load %arg3[%c0_7, %c0_8, %c0_9, %c0_10] : memref<1x4x1x1xf32, #tpu.memory_space<vmem>>, vector<1x4x1x1xf32>
    %c0_11 = arith.constant 0 : index
    %c0_12 = arith.constant 0 : index
    %c0_13 = arith.constant 0 : index
    %c0_14 = arith.constant 0 : index
    %16 = vector.load %arg4[%c0_11, %c0_12, %c0_13, %c0_14] : memref<1x4x1x1xf32, #tpu.memory_space<vmem>>, vector<1x4x1x1xf32>
    %17 = vector.broadcast %14 : vector<2x1x2x128xf32> to vector<2x4x2x128xf32>
    %18 = arith.mulf %6, %17 : vector<2x4x2x128xf32>
    %19 = vector.broadcast %15 : vector<1x4x1x1xf32> to vector<2x4x2x128xf32>
    %20 = arith.mulf %18, %19 : vector<2x4x2x128xf32>
    %21 = vector.broadcast %16 : vector<1x4x1x1xf32> to vector<2x4x2x128xf32>
    %22 = arith.addf %20, %21 : vector<2x4x2x128xf32>
    %c0_15 = arith.constant 0 : index
    %c0_16 = arith.constant 0 : index
    %c0_17 = arith.constant 0 : index
    %c0_18 = arith.constant 0 : index
    %23 = vector.load %arg5[%c0_15, %c0_16, %c0_17, %c0_18] : memref<2x4x2x128xf32, #tpu.memory_space<vmem>>, vector<2x4x2x128xf32>
    tpu.vector_store %arg5[%c0_15, %c0_16, %c0_17, %c0_18], %22 {strides = array<i32>} : memref<2x4x2x128xf32, #tpu.memory_space<vmem>>, vector<2x4x2x128xf32>,
    return
  }
  func.func @transform_0(%arg0: i32, %arg1: i32) -> (i32, i32, i32, i32) {
    %c0_i32 = arith.constant 0 : i32
    %c0_i32_0 = arith.constant 0 : i32
    %c0_i32_1 = arith.constant 0 : i32
    return %arg0, %c0_i32, %arg1, %c0_i32_0 : i32, i32, i32, i32
  }
  func.func @transform_1(%arg0: i32, %arg1: i32) -> (i32, i32, i32, i32) {
    %c0_i32 = arith.constant 0 : i32
    %c0_i32_0 = arith.constant 0 : i32
    %c0_i32_1 = arith.constant 0 : i32
    %c0_i32_2 = arith.constant 0 : i32
    %c0_i32_3 = arith.constant 0 : i32
    return %c0_i32, %c0_i32_0, %c0_i32_1, %c0_i32_2 : i32, i32, i32, i32
  }
  func.func @transform_2(%arg0: i32, %arg1: i32) -> (i32, i32, i32, i32) {
    %c0_i32 = arith.constant 0 : i32
    %c0_i32_0 = arith.constant 0 : i32
    %c0_i32_1 = arith.constant 0 : i32
    %c0_i32_2 = arith.constant 0 : i32
    %c0_i32_3 = arith.constant 0 : i32
    return %c0_i32, %c0_i32_0, %c0_i32_1, %c0_i32_2 : i32, i32, i32, i32
  }
  func.func @transform_3(%arg0: i32, %arg1: i32) -> (i32, i32, i32, i32) {
    %c0_i32 = arith.constant 0 : i32
    %c0_i32_0 = arith.constant 0 : i32
    %c0_i32_1 = arith.constant 0 : i32
    return %arg0, %c0_i32, %arg1, %c0_i32_0 : i32, i32, i32, i32
  }
}

</mosaic_0001>

<llo_original>
// kernel: tpu_custom_call.1
$region0: #{tpu_custom_call.1}
  #allocation0 [shape = 'u32[]', space=smem, size = 0x4, offset = 0x4, fixed_abs, tag = 'smem constant byte address 0x4 - core index']
  #allocation1 [shape = 'u32[144,128]{1,0:T(1,128)}', space=vmem, size = 0x12000, scoped, tag = 'internal scratch']
  %s0 = inlined_call_operand.hbm [shape: f32[2,4,2,128], index: 0, kind: input, shape index: {}]
  %s1 = inlined_call_operand.vmem [shape: f32[1,4,1,1], index: 1, kind: input, shape index: {}]
  %s2 = inlined_call_operand.vmem [shape: f32[1,4,1,1], index: 2, kind: input, shape index: {}]
  %s3 = inlined_call_operand.hbm [shape: f32[2,4,2,128], index: 3, kind: output, shape index: {}]
  %s4 = sld [smem:[#allocation0]]
  $region26: #{tpu_custom_call.1} parent=0
    _
  %s6 = ssub.s32 1, %s4
  %s7 = scalar_select 0, %s6, %s4
  $region1: #{tpu_custom_call.1} parent=0
    #allocation2 [shape = 'u8[8192]{0}', space=vmem, size = 0x2000, scoped, tag = 'input window, operand 0, single buffered']
    #allocation3 [shape = 's32[1]{0}', space=sflag, size = 0x4, scoped, tag = 'scoped memory for tpu_custom_call.1']
    #allocation4 [shape = 's32[1]{0}', space=sflag, size = 0x4, scoped, tag = 'scoped memory for tpu_custom_call.1']
    #allocation5 [shape = 'u8[8192]{0}', space=vmem, size = 0x2000, scoped, tag = 'output window, operand 0, single buffered']
    %8 = vsyncpa [#allocation3], 0
    %9 = vsyncpa [#allocation4], 0
    // Predicated region
    $region2: #{tpu_custom_call.1} parent=1 // pred_check
      _
    $region3: #{tpu_custom_call.1} parent=1 // pred_check_branch
      %11 = sbr.rel (0) target = $region5
    $region4: #{tpu_custom_call.1} parent=1 // pred_region
      %s13 = ssub.s32 256, 256
      %14 = vsyncadd [#allocation3], %s13
      %s15 = sshll.u32 [#allocation2], 4
      %s16 = int_to_ptr.vmem [resolvable:$true] %s15
      %21 = dma.hbm_to_vmem [thread:$0]  %s0, 256, %s16, [#allocation3], 32, 32, 2
    $region5: #{tpu_custom_call.1} parent=1 // pred_fallthru
      _
    // Predicated region
    $region6: #{tpu_custom_call.1} parent=1 // pred_check
      _
    $region7: #{tpu_custom_call.1} parent=1 // pred_check_branch
      %23 = sbr.rel (0) target = $region9
    $region8: #{tpu_custom_call.1} parent=1 // pred_region
      _
    $region9: #{tpu_custom_call.1} parent=1 // pred_fallthru
      _
    // Predicated region
    $region10: #{tpu_custom_call.1} parent=1 // pred_check
      _
    $region11: #{tpu_custom_call.1} parent=1 // pred_check_branch
      %25 = sbr.rel (0) target = $region13
    $region12: #{tpu_custom_call.1} parent=1 // pred_region
      _
    $region13: #{tpu_custom_call.1} parent=1 // pred_fallthru
      _
    // Predicated region
    $region14: #{tpu_custom_call.1} parent=1 // pred_check
      _
    $region15: #{tpu_custom_call.1} parent=1 // pred_check_branch
      %27 = sbr.rel (0) target = $region17
    $region16: #{tpu_custom_call.1} parent=1 // pred_region
      %28 = dma.done [#allocation3], 256
    $region17: #{tpu_custom_call.1} parent=1 // pred_fallthru
      _
    %v29 = vld [vmem:[#allocation2] sm:$0x3]
    %v30 = vld [vmem:[#allocation2 + $0x2] sm:$0x3]
    %v31 = vld [vmem:[#allocation2 + $0x4] sm:$0x3]
    %v32 = vld [vmem:[#allocation2 + $0x6] sm:$0x3]
    %v33 = vld [vmem:[#allocation2 + $0x8] sm:$0x3]
    %v34 = vld [vmem:[#allocation2 + $0xa] sm:$0x3]
    %v35 = vld [vmem:[#allocation2 + $0xc] sm:$0x3]
    %v36 = vld [vmem:[#allocation2 + $0xe] sm:$0x3]
    %vm37 = vcmask 1041408
    %v38 = vsel %vm37, %v29, 0.0
    %v39 = vsel %vm37, %v30, 0.0
    %v40 = vadd.f32 %v38, %v39
    %v41 = vsel %vm37, %v31, 0.0
    %v42 = vadd.f32 %v40, %v41
    %v43 = vsel %vm37, %v32, 0.0
    %v44 = vadd.f32 %v42, %v43
    %v45 = vsel %vm37, %v33, 0.0
    %v46 = vsel %vm37, %v34, 0.0
    %v47 = vadd.f32 %v45, %v46
    %v48 = vsel %vm37, %v35, 0.0
    %v49 = vadd.f32 %v47, %v48
    %v50 = vsel %vm37, %v36, 0.0
    %v51 = vadd.f32 %v49, %v50
    %v52 = vmul.f32 %v44, 0.25
    %v53 = vmul.f32 %v51, 0.25
    %v54 = vsub.f32 %v29, %v52
    %v55 = vsub.f32 %v30, %v52
    %v56 = vsub.f32 %v31, %v52
    %v57 = vsub.f32 %v32, %v52
    %v58 = vsub.f32 %v33, %v53
    %v59 = vsub.f32 %v34, %v53
    %v60 = vsub.f32 %v35, %v53
    %v61 = vsub.f32 %v36, %v53
    %v62 = vmul.f32 %v54, %v54
    %v63 = vmul.f32 %v55, %v55
    %v64 = vmul.f32 %v56, %v56
    %v65 = vmul.f32 %v57, %v57
    %v66 = vmul.f32 %v58, %v58
    %v67 = vmul.f32 %v59, %v59
    %v68 = vmul.f32 %v60, %v60
    %v69 = vmul.f32 %v61, %v61
    %v70 = vsel %vm37, %v62, 0.0
    %v71 = vsel %vm37, %v63, 0.0
    %v72 = vadd.f32 %v70, %v71
    %v73 = vsel %vm37, %v64, 0.0
    %v74 = vadd.f32 %v72, %v73
    %v75 = vsel %vm37, %v65, 0.0
    %v76 = vadd.f32 %v74, %v75
    %v77 = vsel %vm37, %v66, 0.0
    %v78 = vsel %vm37, %v67, 0.0
    %v79 = vadd.f32 %v77, %v78
    %v80 = vsel %vm37, %v68, 0.0
    %v81 = vadd.f32 %v79, %v80
    %v82 = vsel %vm37, %v69, 0.0
    %v83 = vadd.f32 %v81, %v82
    %v84 = vmul.f32 %v76, 0.25
    %v85 = vmul.f32 %v83, 0.25
    %v86 = vadd.f32 %v84, 1e-05
    %v87 = vadd.f32 %v85, 1e-05
    %v88 = vrsqrt.pop %v86
    %v89 = vrsqrt.pop %v87
    %v90 = vld [vmem:[%s1] sm:$0x1]
    %v91 = vld [vmem:[%s1 + $0x1] sm:$0x1]
    %v92 = vld [vmem:[%s1 + $0x2] sm:$0x1]
    %v93 = vld [vmem:[%s1 + $0x3] sm:$0x1]
    %v94 = vld [vmem:[%s2] sm:$0x1]
    %v95 = vld [vmem:[%s2 + $0x1] sm:$0x1]
    %v96 = vld [vmem:[%s2 + $0x2] sm:$0x1]
    %v97 = vld [vmem:[%s2 + $0x3] sm:$0x1]
    %v98 = vmul.f32 %v54, %v88
    %v99 = vmul.f32 %v55, %v88
    %v100 = vmul.f32 %v56, %v88
    %v101 = vmul.f32 %v57, %v88
    %v102 = vmul.f32 %v58, %v89
    %v103 = vmul.f32 %v59, %v89
    %v104 = vmul.f32 %v60, %v89
    %v105 = vmul.f32 %v61, %v89
    %v110 = vlaneseq
    %v111 = vshrl.u32 %v110, 7
    %v112 = vsub.s32 0, %v111
    %v113 = vrot.slane %v90, %v112
    %v114 = vlaneseq
    %v115 = vshrl.u32 %v114, 7
    %v116 = vsub.s32 0, %v115
    %v117 = vrot.slane %v91, %v116
    %v118 = vlaneseq
    %v119 = vshrl.u32 %v118, 7
    %v120 = vsub.s32 0, %v119
    %v121 = vrot.slane %v92, %v120
    %v122 = vlaneseq
    %v123 = vshrl.u32 %v122, 7
    %v124 = vsub.s32 0, %v123
    %v125 = vrot.slane %v93, %v124
    %126 = vset.pattern.permute.xlu0 0
    %127 = vperm.xlu0 %126, %v113
    %v128 = vpop.permute.xlu0 %127
    %130 = vset.pattern.permute.xlu0 0
    %131 = vperm.xlu0 %130, %v117
    %v132 = vpop.permute.xlu0 %131
    %134 = vset.pattern.permute.xlu0 0
    %135 = vperm.xlu0 %134, %v121
    %v136 = vpop.permute.xlu0 %135
    %138 = vset.pattern.permute.xlu0 0
    %139 = vperm.xlu0 %138, %v125
    %v140 = vpop.permute.xlu0 %139
    %v142 = vmul.f32 %v98, %v128
    %v143 = vmul.f32 %v99, %v132
    %v144 = vmul.f32 %v100, %v136
    %v145 = vmul.f32 %v101, %v140
    %v146 = vmul.f32 %v102, %v128
    %v147 = vmul.f32 %v103, %v132
    %v148 = vmul.f32 %v104, %v136
    %v149 = vmul.f32 %v105, %v140
    %v154 = vlaneseq
    %v155 = vshrl.u32 %v154, 7
    %v156 = vsub.s32 0, %v155
    %v157 = vrot.slane %v94, %v156
    %v158 = vlaneseq
    %v159 = vshrl.u32 %v158, 7
    %v160 = vsub.s32 0, %v159
    %v161 = vrot.slane %v95, %v160
    %v162 = vlaneseq
    %v163 = vshrl.u32 %v162, 7
    %v164 = vsub.s32 0, %v163
    %v165 = vrot.slane %v96, %v164
    %v166 = vlaneseq
    %v167 = vshrl.u32 %v166, 7
    %v168 = vsub.s32 0, %v167
    %v169 = vrot.slane %v97, %v168
    %170 = vset.pattern.permute.xlu0 0
    %171 = vperm.xlu0 %170, %v157
    %v172 = vpop.permute.xlu0 %171
    %174 = vset.pattern.permute.xlu0 0
    %175 = vperm.xlu0 %174, %v161
    %v176 = vpop.permute.xlu0 %175
    %178 = vset.pattern.permute.xlu0 0
    %179 = vperm.xlu0 %178, %v165
    %v180 = vpop.permute.xlu0 %179
    %182 = vset.pattern.permute.xlu0 0
    %183 = vperm.xlu0 %182, %v169
    %v184 = vpop.permute.xlu0 %183
    %v186 = vadd.f32 %v142, %v172
    %v187 = vadd.f32 %v143, %v176
    %v188 = vadd.f32 %v144, %v180
    %v189 = vadd.f32 %v145, %v184
    %v190 = vadd.f32 %v146, %v172
    %v191 = vadd.f32 %v147, %v176
    %v192 = vadd.f32 %v148, %v180
    %v193 = vadd.f32 %v149, %v184
    %194 = vst [vmem:[#allocation5] sm:$0x3] %v186
    %195 = vst [vmem:[#allocation5 + $0x2] sm:$0x3] %v187
    %196 = vst [vmem:[#allocation5 + $0x4] sm:$0x3] %v188
    %197 = vst [vmem:[#allocation5 + $0x6] sm:$0x3] %v189
    %198 = vst [vmem:[#allocation5 + $0x8] sm:$0x3] %v190
    %199 = vst [vmem:[#allocation5 + $0xa] sm:$0x3] %v191
    %200 = vst [vmem:[#allocation5 + $0xc] sm:$0x3] %v192
    %201 = vst [vmem:[#allocation5 + $0xe] sm:$0x3] %v193
    // Predicated region
    $region18: #{tpu_custom_call.1} parent=1 // pred_check
      _
    $region19: #{tpu_custom_call.1} parent=1 // pred_check_branch
      %203 = sbr.rel (0) target = $region21
    $region20: #{tpu_custom_call.1} parent=1 // pred_region
      %s205 = ssub.s32 256, 256
      %206 = vsyncadd [#allocation4], %s205
      %s207 = sshll.u32 [#allocation5], 4
      %s208 = int_to_ptr.vmem [resolvable:$true] %s207
      %213 = dma.vmem_to_hbm [thread:$0]  %s208, 256, %s3, [#allocation4], 32, 32, 2
    $region21: #{tpu_custom_call.1} parent=1 // pred_fallthru
      _
    // Predicated region
    $region22: #{tpu_custom_call.1} parent=1 // pred_check
      _
    $region23: #{tpu_custom_call.1} parent=1 // pred_check_branch
      %215 = sbr.rel (0) target = $region25
    $region24: #{tpu_custom_call.1} parent=1 // pred_region
      %216 = dma.done [#allocation4], 256
    $region25: #{tpu_custom_call.1} parent=1 // pred_fallthru
      _
    %217 = vsyncpa [#allocation3], 1
    %218 = vsyncpa [#allocation4], 1

</llo_original>
